<compile_context>
chip_gen: v7x
topology: tpu7x:2x2x1
jax: 0.10.0
libtpu: 0.0.40
codegen_flags: <defaults>
</compile_context>

<pallas_src>
import jax
import jax.numpy as jnp
from jax.experimental import pallas as pl
from jax.experimental.pallas import tpu as pltpu

# ---------------- config (small, deterministic) ----------------
VOCAB = 100
EMBED = 32                  # embedding dim E
NUM_FILTERS = 32            # conv output channels C per kernel size
KERNEL_SIZES = (3, 4, 5)    # must be consecutive (kernel uses KMIN + lane//C)
NUM_CLASS = 4
BATCH = 2
SEQ = 16

KMIN = min(KERNEL_SIZES)
KMAX = max(KERNEL_SIZES)
C3 = NUM_FILTERS * len(KERNEL_SIZES)   # 96 real conv channels
LANE_OUT = 128                         # lane-dense padded width (conv channels & logits)
MAX_BB = 256                           # batch-block cap: R = MAX_BB*SEQ = 4096 rows ->
                                       # ~10 MB of f32 intermediates, fits v7x scoped VMEM


def textcnn_kernel(ids_ref, emb_ref, wconv_ref, whead_ref, mask_ref, out_ref):
    """Fused TextCNN forward for one block of BB sequences.

    ids_ref   : [1, BB*S]          int32 token ids (padded positions -> VOCAB sentinel)
    emb_ref   : [Vpad, E]          f32 embedding table (rows >= VOCAB are zero)
    wconv_ref : [KMAX*E + 8, 128]  f32 fused conv weight, lane-padded; row KMAX*E = biases;
                                   tap j rows [j*E:(j+1)*E] are zero for widths k <= j
    whead_ref : [128 + 8, 128]     f32 head weight (rows 0..95 real, 96..127 zero) + bias row 128
    mask_ref  : [S, 128]           f32 0/1 structural-validity mask (valid window start per lane)
    out_ref   : [BB, 128]          f32 lane-dense logits (cols >= NUM_CLASS are zero)
    """
    S, CP = mask_ref.shape
    Vp, E = emb_ref.shape
    R = ids_ref.shape[1]          # BB * S token rows in this block
    BB = R // S

    # ---- 1) embedding gather as one-hot @ table (MXU); sentinel id hits a zero row.
    ids = ids_ref[...].reshape(R, 1)                                    # [R, 1]
    col = jax.lax.broadcasted_iota(jnp.int32, (R, Vp), 1)               # [R, Vp]
    one_hot = (col == ids).astype(jnp.float32)
    x = jnp.dot(one_hot, emb_ref[...], preferred_element_type=jnp.float32)   # [R, E]

    # ---- 2) all conv widths as KMAX shifted accumulating matmuls (lane-dense CP=128).
    # acc[p, c(k)] = sum_{j<k} x[p+j] @ w_k[j*E:(j+1)*E, :]; taps j>=k are zero in the fused
    # weight, so wrap-around / cross-sequence rows never reach a valid output position.
    acc = jnp.dot(x, wconv_ref[0:E, :], preferred_element_type=jnp.float32)
    for j in range(1, KMAX):
        xs = pltpu.roll(x, shift=R - j, axis=0)            # xs[p] = x[(p + j) % R]
        acc = acc + jnp.dot(xs, wconv_ref[j * E:(j + 1) * E, :],
                            preferred_element_type=jnp.float32)          # [R, CP]
    bias = wconv_ref[KMAX * E:KMAX * E + 1, :]                           # [1, CP]
    conv = jnp.maximum(acc + bias, 0.0)                                  # ReLU

    # ---- 3) mask structurally invalid tail positions (precomputed 0/1 mask; exact because
    # ReLU guarantees non-negative values), then max over time.
    conv3 = conv.reshape(BB, S, CP)
    pooled = jnp.max(conv3 * mask_ref[...][None, :, :], axis=1)          # [BB, CP]

    # ---- 4) classifier head, lane-dense padded output.
    out_ref[...] = (jnp.dot(pooled, whead_ref[0:CP, :],
                            preferred_element_type=jnp.float32)
                    + whead_ref[CP:CP + 1, :])


def init_params(key):
    """Deterministic parameter init matching TextCNN shapes (PyTorch layout)."""
    ks = jax.random.split(key, 2 + 2 * len(KERNEL_SIZES) + 2)
    idx = 0
    params = {}
    params["embedding"] = 0.02 * jax.random.normal(
        ks[idx], (VOCAB, EMBED), jnp.float32); idx += 1
    for k in KERNEL_SIZES:
        params[f"w{k}"] = 0.05 * jax.random.normal(
            ks[idx], (k * EMBED, NUM_FILTERS), jnp.float32); idx += 1
        params[f"b{k}"] = 0.01 * jax.random.normal(
            ks[idx], (1, NUM_FILTERS), jnp.float32); idx += 1
    params["wfc"] = 0.05 * jax.random.normal(
        ks[idx], (C3, NUM_CLASS), jnp.float32); idx += 1
    params["bfc"] = 0.01 * jax.random.normal(
        ks[idx], (1, NUM_CLASS), jnp.float32); idx += 1
    return params


def pack_params(params):
    """One-time packing of the 10 small tensors into 3 kernel-friendly, lane-dense buffers."""
    C = NUM_FILTERS
    CP = LANE_OUT

    # Embedding table padded to a 128-row multiple; index VOCAB (and above) is a
    # guaranteed zero row used as the padding-token sentinel.
    VP = ((VOCAB + 1 + 127) // 128) * 128
    emb = jnp.zeros((VP, EMBED), jnp.float32).at[:VOCAB].set(params["embedding"])

    # Fused conv weight, lane-padded to 128 output channels: tap-j block for width k lives in
    # rows [j*E:(j+1)*E] of channel group gi, zero for j >= k and for lanes >= C3.
    # Bias row at KMAX*E (8-row padded tail).
    wconv = jnp.zeros((KMAX * EMBED + 8, CP), jnp.float32)
    for gi, k in enumerate(KERNEL_SIZES):
        wconv = wconv.at[:k * EMBED, gi * C:(gi + 1) * C].set(params[f"w{k}"])
        wconv = wconv.at[KMAX * EMBED, gi * C:(gi + 1) * C].set(params[f"b{k}"][0])

    # Classifier head packed + lane-padded: rows 0..C3-1 = wfc, rows C3..CP-1 zero (padding
    # lanes of pooled), row CP = bfc.
    whead = jnp.zeros((CP + 8, LANE_OUT), jnp.float32)
    whead = whead.at[:C3, :NUM_CLASS].set(params["wfc"])
    whead = whead.at[CP, :NUM_CLASS].set(params["bfc"][0])

    return {"emb": emb, "wconv": wconv, "whead": whead}


def classifier_forward(packed, input_ids, attention_mask=None, token_type_ids=None):
    """Forward pass equivalent to Classifier(model_type='CNN')(input_ids, attention_mask).

    input_ids      : [B, S] int32
    attention_mask : [B, S] (any numeric dtype) or None
    returns        : [B, NUM_CLASS] float32 logits
    """
    del token_type_ids  # unused by the CNN branch
    B, S = input_ids.shape
    assert S >= KMAX, "sequence length must be >= the widest conv kernel"

    # Fold the attention mask into the ids: padded positions get sentinel id VOCAB, whose
    # embedding row is zero -> identical semantics to zeroing the embeddings.
    if attention_mask is None:
        ids = input_ids.astype(jnp.int32)
    else:
        ids = jnp.where(attention_mask > 0, input_ids, VOCAB).astype(jnp.int32)

    emb, wconv, whead = packed["emb"], packed["wconv"], packed["whead"]
    VP, E = emb.shape
    CP = wconv.shape[1]
    LO = whead.shape[1]

    # Batch block: big enough to fill MXU rows and amortize the ~0.35 us per-grid-step
    # overhead, bounded so per-step f32 intermediates (one-hot + acc + conv ~ R*1.7 KB)
    # stay well inside v7x's 32 MiB scoped VMEM (64 MiB physical).
    if B <= MAX_BB:
        BB = B
    else:
        BB = MAX_BB
        while B % BB != 0:
            BB //= 2
    assert B % BB == 0
    grid = (B // BB,)

    # Lane-dense ids presentation: one [1, BB*S] row per grid step.
    ids2 = ids.reshape(B // BB, BB * S)

    # Shape-only validity mask, hoisted out of the kernel: mask[t, lane] = 1 iff the conv
    # width k owning this lane has a real window starting at t (t <= S-k) and lane < C3.
    t_idx = jnp.arange(S, dtype=jnp.int32)[:, None]
    lane = jnp.arange(CP, dtype=jnp.int32)[None, :]
    k_lane = KMIN + lane // NUM_FILTERS
    pool_mask = ((t_idx <= (S - k_lane)) & (lane < C3)).astype(jnp.float32)   # [S, CP]

    flops_per_step = 2 * (BB * S) * (VP * E + KMAX * E * CP) + 2 * BB * CP * LO
    cost = pl.CostEstimate(
        flops=flops_per_step * grid[0],
        transcendentals=0,
        bytes_accessed=4 * (int(ids.size) + int(emb.size) + int(wconv.size)
                            + int(whead.size) + int(pool_mask.size) + B * LO),
    )

    out = pl.pallas_call(
        textcnn_kernel,
        out_shape=jax.ShapeDtypeStruct((B, LO), jnp.float32),
        grid_spec=pltpu.PrefetchScalarGridSpec(
            num_scalar_prefetch=0,
            grid=grid,
            in_specs=[
                pl.BlockSpec((1, BB * S), lambda i: (i, 0)),        # ids, lane-dense row
                pl.BlockSpec((VP, E), lambda i: (0, 0)),            # embedding table
                pl.BlockSpec(tuple(wconv.shape), lambda i: (0, 0)), # fused conv weight
                pl.BlockSpec(tuple(whead.shape), lambda i: (0, 0)), # head weight + bias
                pl.BlockSpec((S, CP), lambda i: (0, 0)),            # pooling validity mask
            ],
            out_specs=pl.BlockSpec((BB, LO), lambda i: (i, 0)),
        ),
        compiler_params=pltpu.CompilerParams(
            dimension_semantics=("parallel",)),
        cost_estimate=cost,
    )(ids2, emb, wconv, whead, pool_mask)

    return out[:, :NUM_CLASS]


def reference_forward(params, input_ids, attention_mask):
    """Pure-JAX reference (mirrors the PyTorch TextCNN forward) for correctness."""
    x = jnp.take(params["embedding"], input_ids, axis=0)
    x = x * attention_mask.astype(jnp.float32)[:, :, None]
    B, S, E = x.shape
    pooled = []
    for k in KERNEL_SIZES:
        T = S - k + 1
        windows = jnp.concatenate([x[:, j:j + T, :] for j in range(k)], axis=-1)
        conv = jnp.einsum("btd,dc->btc", windows, params[f"w{k}"],
                          precision=jax.lax.Precision.HIGHEST) + params[f"b{k}"][None]
        pooled.append(jnp.max(jax.nn.relu(conv), axis=1))
    feat = jnp.concatenate(pooled, axis=-1)
    return jnp.dot(feat, params["wfc"],
                   precision=jax.lax.Precision.HIGHEST) + params["bfc"]


if __name__ == "__main__":
    key = jax.random.PRNGKey(0)
    pkey, ikey, ikey2 = jax.random.split(key, 3)
    params = init_params(pkey)
    packed = pack_params(params)

    fwd = jax.jit(classifier_forward)

    # --- small demo (B=2, S=16): single grid step, block == full array.
    input_ids = jax.random.randint(ikey, (BATCH, SEQ), 0, VOCAB, dtype=jnp.int32)
    attention_mask = jnp.ones((BATCH, SEQ), jnp.float32).at[1, -3:].set(0.0)
    logits = jax.block_until_ready(fwd(packed, input_ids, attention_mask))
    ref = reference_forward(params, input_ids, attention_mask)
    assert logits.shape == (BATCH, NUM_CLASS)
    assert jnp.allclose(logits, ref, atol=1e-4, rtol=1e-4), \
        f"mismatch vs reference: max abs diff {jnp.max(jnp.abs(logits - ref))}"

    # --- larger batch: exercises the tiled path (BB=256, grid=(2,), parallel across cores).
    B2 = 512
    ids_big = jax.random.randint(ikey2, (B2, SEQ), 0, VOCAB, dtype=jnp.int32)
    mask_big = jnp.ones((B2, SEQ), jnp.float32).at[:, -2:].set(0.0)
    logits_big = jax.block_until_ready(fwd(packed, ids_big, mask_big))
    ref_big = reference_forward(params, ids_big, mask_big)
    assert logits_big.shape == (B2, NUM_CLASS)
    assert jnp.allclose(logits_big, ref_big, atol=1e-4, rtol=1e-4), \
        f"big-batch mismatch: max abs diff {jnp.max(jnp.abs(logits_big - ref_big))}"

    print("KERNEL_OK")
</pallas_src>

<mosaic_0001>
module attributes {stable_mosaic.version = 11 : i64} {
  func.func @textcnn_kernel(%arg0: i32, %arg1: memref<1x32xi32, #tpu.memory_space<vmem>>, %arg2: memref<128x32xf32, #tpu.memory_space<vmem>>, %arg3: memref<168x128xf32, #tpu.memory_space<vmem>>, %arg4: memref<136x128xf32, #tpu.memory_space<vmem>>, %arg5: memref<16x128xf32, #tpu.memory_space<vmem>>, %arg6: memref<2x128xf32, #tpu.memory_space<vmem>>) attributes {dimension_semantics = [#tpu.dimension_semantics<parallel>], iteration_bounds = array<i64: 1>, scalar_prefetch = 0 : i64, scratch_operands = 0 : i64, tpu.core_type = #tpu.core_type<tc>, window_params = [{transform_indices = @transform_0, window_bounds = array<i64: 1, 32>}, {pipeline_mode = #tpu.pipeline_mode<synchronous>, transform_indices = @transform_1, window_bounds = array<i64: 128, 32>}, {pipeline_mode = #tpu.pipeline_mode<synchronous>, transform_indices = @transform_2, window_bounds = array<i64: 168, 128>}, {pipeline_mode = #tpu.pipeline_mode<synchronous>, transform_indices = @transform_3, window_bounds = array<i64: 136, 128>}, {pipeline_mode = #tpu.pipeline_mode<synchronous>, transform_indices = @transform_4, window_bounds = array<i64: 16, 128>}, {transform_indices = @transform_5, window_bounds = array<i64: 2, 128>}]} {
    %c0 = arith.constant 0 : index
    %c0_0 = arith.constant 0 : index
    %0 = vector.load %arg1[%c0, %c0_0] : memref<1x32xi32, #tpu.memory_space<vmem>>, vector<1x32xi32>
    %1 = vector.shape_cast %0 : vector<1x32xi32> to vector<32x1xi32>
    %2 = tpu.iota {dimensions = array<i32: 1>} : vector<32x128xi32>
    %3 = vector.broadcast %1 : vector<32x1xi32> to vector<32x128xi32>
    %4 = arith.cmpi eq, %2, %3 : vector<32x128xi32>
    %5 = arith.extui %4 : vector<32x128xi1> to vector<32x128xi32>
    %6 = arith.sitofp %5 : vector<32x128xi32> to vector<32x128xf32>
    %c0_1 = arith.constant 0 : index
    %c0_2 = arith.constant 0 : index
    %7 = vector.load %arg2[%c0_1, %c0_2] : memref<128x32xf32, #tpu.memory_space<vmem>>, vector<128x32xf32>
    %cst = arith.constant dense<0.000000e+00> : vector<32x32xf32>
    %8 = tpu.matmul %6, %7, %cst {dimension_numbers = #tpu.dot_dimension_numbers<[1], [0], [0], [1], [0, 0, 1, 1], [], []>} : vector<32x128xf32>, vector<128x32xf32>, vector<32x32xf32> -> vector<32x32xf32>
    %c0_3 = arith.constant 0 : index
    %c0_4 = arith.constant 0 : index
    %9 = vector.load %arg3[%c0_3, %c0_4] : memref<168x128xf32, #tpu.memory_space<vmem>>, vector<32x128xf32>
    %cst_5 = arith.constant dense<0.000000e+00> : vector<32x128xf32>
    %10 = tpu.matmul %8, %9, %cst_5 {dimension_numbers = #tpu.dot_dimension_numbers<[1], [0], [0], [1], [0, 0, 1, 1], [], []>} : vector<32x32xf32>, vector<32x128xf32>, vector<32x128xf32> -> vector<32x128xf32>
    %c31_i32 = arith.constant 31 : i32
    %11 = tpu.dynamic_rotate %8 by %c31_i32 dim 0 : vector<32x32xf32>, i32 -> vector<32x32xf32>
    %c32 = arith.constant 32 : index
    %c0_6 = arith.constant 0 : index
    %12 = vector.load %arg3[%c32, %c0_6] : memref<168x128xf32, #tpu.memory_space<vmem>>, vector<32x128xf32>
    %cst_7 = arith.constant dense<0.000000e+00> : vector<32x128xf32>
    %13 = tpu.matmul %11, %12, %cst_7 {dimension_numbers = #tpu.dot_dimension_numbers<[1], [0], [0], [1], [0, 0, 1, 1], [], []>} : vector<32x32xf32>, vector<32x128xf32>, vector<32x128xf32> -> vector<32x128xf32>
    %14 = arith.addf %10, %13 : vector<32x128xf32>
    %c30_i32 = arith.constant 30 : i32
    %15 = tpu.dynamic_rotate %8 by %c30_i32 dim 0 : vector<32x32xf32>, i32 -> vector<32x32xf32>
    %c64 = arith.constant 64 : index
    %c0_8 = arith.constant 0 : index
    %16 = vector.load %arg3[%c64, %c0_8] : memref<168x128xf32, #tpu.memory_space<vmem>>, vector<32x128xf32>
    %cst_9 = arith.constant dense<0.000000e+00> : vector<32x128xf32>
    %17 = tpu.matmul %15, %16, %cst_9 {dimension_numbers = #tpu.dot_dimension_numbers<[1], [0], [0], [1], [0, 0, 1, 1], [], []>} : vector<32x32xf32>, vector<32x128xf32>, vector<32x128xf32> -> vector<32x128xf32>
    %18 = arith.addf %14, %17 : vector<32x128xf32>
    %c29_i32 = arith.constant 29 : i32
    %19 = tpu.dynamic_rotate %8 by %c29_i32 dim 0 : vector<32x32xf32>, i32 -> vector<32x32xf32>
    %c96 = arith.constant 96 : index
    %c0_10 = arith.constant 0 : index
    %20 = vector.load %arg3[%c96, %c0_10] : memref<168x128xf32, #tpu.memory_space<vmem>>, vector<32x128xf32>
    %cst_11 = arith.constant dense<0.000000e+00> : vector<32x128xf32>
    %21 = tpu.matmul %19, %20, %cst_11 {dimension_numbers = #tpu.dot_dimension_numbers<[1], [0], [0], [1], [0, 0, 1, 1], [], []>} : vector<32x32xf32>, vector<32x128xf32>, vector<32x128xf32> -> vector<32x128xf32>
    %22 = arith.addf %18, %21 : vector<32x128xf32>
    %c28_i32 = arith.constant 28 : i32
    %23 = tpu.dynamic_rotate %8 by %c28_i32 dim 0 : vector<32x32xf32>, i32 -> vector<32x32xf32>
    %c128 = arith.constant 128 : index
    %c0_12 = arith.constant 0 : index
    %24 = vector.load %arg3[%c128, %c0_12] : memref<168x128xf32, #tpu.memory_space<vmem>>, vector<32x128xf32>
    %cst_13 = arith.constant dense<0.000000e+00> : vector<32x128xf32>
    %25 = tpu.matmul %23, %24, %cst_13 {dimension_numbers = #tpu.dot_dimension_numbers<[1], [0], [0], [1], [0, 0, 1, 1], [], []>} : vector<32x32xf32>, vector<32x128xf32>, vector<32x128xf32> -> vector<32x128xf32>
    %26 = arith.addf %22, %25 : vector<32x128xf32>
    %c160 = arith.constant 160 : index
    %c0_14 = arith.constant 0 : index
    %27 = vector.load %arg3[%c160, %c0_14] : memref<168x128xf32, #tpu.memory_space<vmem>>, vector<1x128xf32>
    %28 = vector.broadcast %27 : vector<1x128xf32> to vector<32x128xf32>
    %29 = arith.addf %26, %28 : vector<32x128xf32>
    %cst_15 = arith.constant 0.000000e+00 : f32
    %30 = vector.broadcast %cst_15 : f32 to vector<32x128xf32>
    %31 = arith.maximumf %29, %30 : vector<32x128xf32>
    %32 = vector.shape_cast %31 : vector<32x128xf32> to vector<2x16x128xf32>
    %c0_16 = arith.constant 0 : index
    %c0_17 = arith.constant 0 : index
    %33 = vector.load %arg5[%c0_16, %c0_17] : memref<16x128xf32, #tpu.memory_space<vmem>>, vector<16x128xf32>
    %34 = vector.shape_cast %33 : vector<16x128xf32> to vector<1x16x128xf32>
    %35 = vector.broadcast %34 : vector<1x16x128xf32> to vector<2x16x128xf32>
    %36 = arith.mulf %32, %35 : vector<2x16x128xf32>
    %cst_18 = arith.constant dense<0xFF800000> : vector<2x128xf32>
    %37 = vector.multi_reduction <maximumf>, %36, %cst_18 [1] : vector<2x16x128xf32> to vector<2x128xf32>
    %c0_19 = arith.constant 0 : index
    %c0_20 = arith.constant 0 : index
    %38 = vector.load %arg4[%c0_19, %c0_20] : memref<136x128xf32, #tpu.memory_space<vmem>>, vector<128x128xf32>
    %cst_21 = arith.constant dense<0.000000e+00> : vector<2x128xf32>
    %39 = tpu.matmul %37, %38, %cst_21 {dimension_numbers = #tpu.dot_dimension_numbers<[1], [0], [0], [1], [0, 0, 1, 1], [], []>} : vector<2x128xf32>, vector<128x128xf32>, vector<2x128xf32> -> vector<2x128xf32>
    %c128_22 = arith.constant 128 : index
    %c0_23 = arith.constant 0 : index
    %40 = vector.load %arg4[%c128_22, %c0_23] : memref<136x128xf32, #tpu.memory_space<vmem>>, vector<1x128xf32>
    %41 = vector.broadcast %40 : vector<1x128xf32> to vector<2x128xf32>
    %42 = arith.addf %39, %41 : vector<2x128xf32>
    %c0_24 = arith.constant 0 : index
    %c0_25 = arith.constant 0 : index
    %43 = vector.load %arg6[%c0_24, %c0_25] : memref<2x128xf32, #tpu.memory_space<vmem>>, vector<2x128xf32>
    tpu.vector_store %arg6[%c0_24, %c0_25], %42 {strides = array<i32>} : memref<2x128xf32, #tpu.memory_space<vmem>>, vector<2x128xf32>,
    return
  }
  func.func @transform_0(%arg0: i32) -> (i32, i32) {
    %c0_i32 = arith.constant 0 : i32
    %c0_i32_0 = arith.constant 0 : i32
    return %arg0, %c0_i32 : i32, i32
  }
  func.func @transform_1(%arg0: i32) -> (i32, i32) {
    %c0_i32 = arith.constant 0 : i32
    %c0_i32_0 = arith.constant 0 : i32
    %c0_i32_1 = arith.constant 0 : i32
    return %c0_i32, %c0_i32_0 : i32, i32
  }
  func.func @transform_2(%arg0: i32) -> (i32, i32) {
    %c0_i32 = arith.constant 0 : i32
    %c0_i32_0 = arith.constant 0 : i32
    %c0_i32_1 = arith.constant 0 : i32
    return %c0_i32, %c0_i32_0 : i32, i32
  }
  func.func @transform_3(%arg0: i32) -> (i32, i32) {
    %c0_i32 = arith.constant 0 : i32
    %c0_i32_0 = arith.constant 0 : i32
    %c0_i32_1 = arith.constant 0 : i32
    return %c0_i32, %c0_i32_0 : i32, i32
  }
  func.func @transform_4(%arg0: i32) -> (i32, i32) {
    %c0_i32 = arith.constant 0 : i32
    %c0_i32_0 = arith.constant 0 : i32
    %c0_i32_1 = arith.constant 0 : i32
    return %c0_i32, %c0_i32_0 : i32, i32
  }
  func.func @transform_5(%arg0: i32) -> (i32, i32) {
    %c0_i32 = arith.constant 0 : i32
    %c0_i32_0 = arith.constant 0 : i32
    return %arg0, %c0_i32 : i32, i32
  }
}

</mosaic_0001>

<llo_original>
// kernel: classifier_forward.1
$region0: #{classifier_forward.1}
  #allocation0 [shape = 'u32[]', space=smem, size = 0x4, offset = 0x4, fixed_abs, tag = 'smem constant byte address 0x4 - core index']
  #allocation1 [shape = 'u32[144,128]{1,0:T(1,128)}', space=vmem, size = 0x12000, scoped, tag = 'internal scratch']
  %s0 = inlined_call_operand.vmem [shape: s32[1,32], index: 0, kind: input, shape index: {}]
  %s1 = inlined_call_operand.vmem [shape: f32[128,32], index: 1, kind: input, shape index: {}]
  %s2 = inlined_call_operand.vmem [shape: f32[168,128], index: 2, kind: input, shape index: {}]
  %s3 = inlined_call_operand.hbm [shape: f32[136,128], index: 3, kind: input, shape index: {}]
  %s4 = inlined_call_operand.vmem [shape: f32[16,128], index: 4, kind: input, shape index: {}]
  %s5 = inlined_call_operand.hbm [shape: f32[2,128], index: 5, kind: output, shape index: {}]
  %s6 = sld [smem:[#allocation0]]
  $region34: #{classifier_forward.1} parent=0
    _
  %s8 = ssub.s32 1, %s6
  %s9 = scalar_select 0, %s8, %s6
  $region1: #{classifier_forward.1} parent=0
    #allocation2 [shape = 'u8[69632]{0}', space=vmem, size = 0x11000, scoped, tag = 'input window, operand 3, single buffered']
    #allocation3 [shape = 's32[1]{0}', space=sflag, size = 0x4, scoped, tag = 'scoped memory for classifier_forward.1']
    #allocation4 [shape = 's32[1]{0}', space=sflag, size = 0x4, scoped, tag = 'scoped memory for classifier_forward.1']
    #allocation5 [shape = 'u8[1024]{0}', space=vmem, size = 0x400, scoped, tag = 'output window, operand 0, single buffered']
    %10 = vsyncpa [#allocation3], 0
    %11 = vsyncpa [#allocation4], 0
    // Predicated region
    $region2: #{classifier_forward.1} parent=1 // pred_check
      _
    $region3: #{classifier_forward.1} parent=1 // pred_check_branch
      %13 = sbr.rel (0) target = $region5
    $region4: #{classifier_forward.1} parent=1 // pred_region
      _
    $region5: #{classifier_forward.1} parent=1 // pred_fallthru
      _
    // Predicated region
    $region6: #{classifier_forward.1} parent=1 // pred_check
      _
    $region7: #{classifier_forward.1} parent=1 // pred_check_branch
      %15 = sbr.rel (0) target = $region9
    $region8: #{classifier_forward.1} parent=1 // pred_region
      _
    $region9: #{classifier_forward.1} parent=1 // pred_fallthru
      _
    // Predicated region
    $region10: #{classifier_forward.1} parent=1 // pred_check
      _
    $region11: #{classifier_forward.1} parent=1 // pred_check_branch
      %17 = sbr.rel (0) target = $region13
    $region12: #{classifier_forward.1} parent=1 // pred_region
      _
    $region13: #{classifier_forward.1} parent=1 // pred_fallthru
      _
    // Predicated region
    $region14: #{classifier_forward.1} parent=1 // pred_check
      _
    $region15: #{classifier_forward.1} parent=1 // pred_check_branch
      %19 = sbr.rel (0) target = $region17
    $region16: #{classifier_forward.1} parent=1 // pred_region
      %s21 = ssub.s32 2176, 2176
      %22 = vsyncadd [#allocation3], %s21
      %s23 = sshll.u32 [#allocation2], 4
      %s24 = int_to_ptr.vmem [resolvable:$true] %s23
      %29 = dma.hbm_to_vmem [thread:$0]  %s3, 2176, %s24, [#allocation3], 128, 128, 8
    $region17: #{classifier_forward.1} parent=1 // pred_fallthru
      _
    // Predicated region
    $region18: #{classifier_forward.1} parent=1 // pred_check
      _
    $region19: #{classifier_forward.1} parent=1 // pred_check_branch
      %31 = sbr.rel (0) target = $region21
    $region20: #{classifier_forward.1} parent=1 // pred_region
      _
    $region21: #{classifier_forward.1} parent=1 // pred_fallthru
      _
    // Predicated region
    $region22: #{classifier_forward.1} parent=1 // pred_check
      _
    $region23: #{classifier_forward.1} parent=1 // pred_check_branch
      %33 = sbr.rel (0) target = $region25
    $region24: #{classifier_forward.1} parent=1 // pred_region
      %34 = dma.done [#allocation3], 2176
    $region25: #{classifier_forward.1} parent=1 // pred_fallthru
      _
    %v35 = vld [vmem:[%s0] sm:$0x1]
    %v36 = vlaneseq
    %v37 = vshrl.u32 %v36, 7
    %v38 = vsub.s32 0, %v37
    %v39 = vrot.slane %v35, %v38
    %41 = vbcast.lane.b32.xlu0 %v39, 256
    %v42 = vpop.permute.xlu0 %41
    %s44 = sor.u32 256, 8
    %45 = vbcast.lane.b32.xlu0 %v39, %s44
    %v46 = vpop.permute.xlu0 %45
    %s48 = sor.u32 256, 16
    %49 = vbcast.lane.b32.xlu0 %v39, %s48
    %v50 = vpop.permute.xlu0 %49
    %s52 = sor.u32 256, 24
    %53 = vbcast.lane.b32.xlu0 %v39, %s52
    %v54 = vpop.permute.xlu0 %53
    %v55 = vlaneseq
    %v56 = vand.u32 %v55, 127
    %vm57 = vcmp.eq.s32.totalorder %v56, %v42
    %vm58 = vcmp.eq.s32.totalorder %v56, %v46
    %vm59 = vcmp.eq.s32.totalorder %v56, %v50
    %vm60 = vcmp.eq.s32.totalorder %v56, %v54
    %v61 = vsel %vm57, 1, 0
    %v62 = vsel %vm58, 1, 0
    %v63 = vsel %vm59, 1, 0
    %v64 = vsel %vm60, 1, 0
    %v65 = vcvt.s32.f32 %v61
    %v66 = vcvt.s32.f32 %v62
    %v67 = vcvt.s32.f32 %v63
    %v68 = vcvt.s32.f32 %v64
    %v69 = vld [vmem:[%s1] sm:$0xff]
    %v70 = vld [vmem:[%s1 + $0x8] sm:$0xff]
    %v71 = vld [vmem:[%s1 + $0x10] sm:$0xff]
    %v72 = vld [vmem:[%s1 + $0x18] sm:$0xff]
    %v73 = vld [vmem:[%s1 + $0x20] sm:$0xff]
    %v74 = vld [vmem:[%s1 + $0x28] sm:$0xff]
    %v75 = vld [vmem:[%s1 + $0x30] sm:$0xff]
    %v76 = vld [vmem:[%s1 + $0x38] sm:$0xff]
    %v77 = vld [vmem:[%s1 + $0x40] sm:$0xff]
    %v78 = vld [vmem:[%s1 + $0x48] sm:$0xff]
    %v79 = vld [vmem:[%s1 + $0x50] sm:$0xff]
    %v80 = vld [vmem:[%s1 + $0x58] sm:$0xff]
    %v81 = vld [vmem:[%s1 + $0x60] sm:$0xff]
    %v82 = vld [vmem:[%s1 + $0x68] sm:$0xff]
    %v83 = vld [vmem:[%s1 + $0x70] sm:$0xff]
    %v84 = vld [vmem:[%s1 + $0x78] sm:$0xff]
    %85 = vmatprep.subr.mxu0 0.0
    %86 = vmatpush1.msra.mxu0 %v69
    %87 = vmatprep.subr.mxu0 0.0
    %88 = vmatpush1.msra.mxu0 %v70
    %89 = vmatprep.subr.mxu0 0.0
    %90 = vmatpush1.msra.mxu0 %v71
    %91 = vmatprep.subr.mxu0 0.0
    %92 = vmatpush1.msra.mxu0 %v72
    %93 = vmatprep.subr.mxu0 0.0
    %94 = vmatpush1.msra.mxu0 %v73
    %95 = vmatprep.subr.mxu0 0.0
    %96 = vmatpush1.msra.mxu0 %v74
    %97 = vmatprep.subr.mxu0 0.0
    %98 = vmatpush1.msra.mxu0 %v75
    %99 = vmatprep.subr.mxu0 0.0
    %100 = vmatpush1.msra.mxu0 %v76
    %101 = vmatprep.subr.mxu0 0.0
    %102 = vmatpush1.msra.mxu0 %v77
    %103 = vmatprep.subr.mxu0 0.0
    %104 = vmatpush1.msra.mxu0 %v78
    %105 = vmatprep.subr.mxu0 0.0
    %106 = vmatpush1.msra.mxu0 %v79
    %107 = vmatprep.subr.mxu0 0.0
    %108 = vmatpush1.msra.mxu0 %v80
    %109 = vmatprep.subr.mxu0 0.0
    %110 = vmatpush1.msra.mxu0 %v81
    %111 = vmatprep.subr.mxu0 0.0
    %112 = vmatpush1.msra.mxu0 %v82
    %113 = vmatprep.subr.mxu0 0.0
    %114 = vmatpush1.msra.mxu0 %v83
    %115 = vmatprep.subr.mxu0 0.0
    %116 = vmatpush1.msra.mxu0 %v84
    %117 = vmatprep.subr.mxu0 0.0
    %118 = vmatpush1.msra.mxu0 0.0
    %119 = vmatprep.subr.mxu0 0.0
    %120 = vmatpush1.msra.mxu0 0.0
    %121 = vmatprep.subr.mxu0 0.0
    %122 = vmatpush1.msra.mxu0 0.0
    %123 = vmatprep.subr.mxu0 0.0
    %124 = vmatpush1.msra.mxu0 0.0
    %125 = vmatprep.subr.mxu0 0.0
    %126 = vmatpush1.msra.mxu0 0.0
    %127 = vmatprep.subr.mxu0 0.0
    %128 = vmatpush1.msra.mxu0 0.0
    %129 = vmatprep.subr.mxu0 0.0
    %130 = vmatpush1.msra.mxu0 0.0
    %131 = vmatprep.subr.mxu0 0.0
    %132 = vmatpush1.msra.mxu0 0.0
    %133 = vmatprep.subr.mxu0 0.0
    %134 = vmatpush1.msra.mxu0 0.0
    %135 = vmatprep.subr.mxu0 0.0
    %136 = vmatpush1.msra.mxu0 0.0
    %137 = vmatprep.subr.mxu0 0.0
    %138 = vmatpush1.msra.mxu0 0.0
    %139 = vmatprep.subr.mxu0 0.0
    %140 = vmatpush1.msra.mxu0 0.0
    %141 = vmatprep.subr.mxu0 0.0
    %142 = vmatpush1.msra.mxu0 0.0
    %143 = vmatprep.subr.mxu0 0.0
    %144 = vmatpush1.msra.mxu0 0.0
    %145 = vmatprep.subr.mxu0 0.0
    %146 = vmatpush1.msra.mxu0 0.0
    %147 = vmatprep.subr.mxu0 0.0
    %148 = vmatpush1.msra.mxu0 0.0
    %149 = vmatprep.mubr.f32.mxu0 0.0
    %150 = vmatmul.mubr.f32.gmra.mrb[0].mxu0 %v65
    %v151 = vpop.f32.mrb[0].mxu0
    %v152 = vadd.f32 0.0, %v151
    %v153 = vpop.f32.mrb[0].mxu0
    %154 = vmatprep.mubr.f32.mxu0 0.0
    %155 = vmatmul.mubr.f32.gmra.mrb[0].mxu0 %v66
    %v156 = vpop.f32.mrb[0].mxu0
    %v157 = vadd.f32 0.0, %v156
    %v158 = vpop.f32.mrb[0].mxu0
    %159 = vmatprep.mubr.f32.mxu0 0.0
    %160 = vmatmul.mubr.f32.gmra.mrb[0].mxu0 %v67
    %v161 = vpop.f32.mrb[0].mxu0
    %v162 = vadd.f32 0.0, %v161
    %v163 = vpop.f32.mrb[0].mxu0
    %164 = vmatprep.mubr.f32.mxu0 0.0
    %165 = vmatmul.mubr.f32.gmra.mrb[0].mxu0 %v68
    %v166 = vpop.f32.mrb[0].mxu0
    %v167 = vadd.f32 0.0, %v166
    %v168 = vpop.f32.mrb[0].mxu0
    %169 = vdwg.mxu0
    %v170 = vld [vmem:[%s2] sm:$0xff]
    %v171 = vld [vmem:[%s2 + $0x8] sm:$0xff]
    %v172 = vld [vmem:[%s2 + $0x10] sm:$0xff]
    %v173 = vld [vmem:[%s2 + $0x18] sm:$0xff]
    %v174 = vrot.slane %v152, 1
    %v175 = vrot.slane %v157, 1
    %v176 = vrot.slane %v162, 1
    %v177 = vrot.slane %v167, 1
    %v178 = vlaneseq
    %v179 = vshrl.u32 %v178, 7
    %vm180 = vcmp.lt.s32.totalorder %v179, 7
    %v181 = vsel %vm180, %v176, %v177
    %v182 = vsel %vm180, %v175, %v176
    %v183 = vsel %vm180, %v174, %v175
    %v184 = vsel %vm180, %v177, %v174
    %v185 = vld [vmem:[%s2 + $0x20] sm:$0xff]
    %v186 = vld [vmem:[%s2 + $0x28] sm:$0xff]
    %v187 = vld [vmem:[%s2 + $0x30] sm:$0xff]
    %v188 = vld [vmem:[%s2 + $0x38] sm:$0xff]
    %vm189 = vcmask 261120
    %v191 = vsel %vm189, %v183, 0
    %v194 = vsel %vm189, %v182, 0
    %v197 = vsel %vm189, %v181, 0
    %v200 = vsel %vm189, %v184, 0
    %202 = vmatprep.subr.mxu0 0.0
    %203 = vmatpush1.msra.mxu0 %v185
    %204 = vmatprep.subr.mxu0 0.0
    %205 = vmatpush1.msra.mxu0 %v186
    %206 = vmatprep.subr.mxu0 0.0
    %207 = vmatpush1.msra.mxu0 %v187
    %208 = vmatprep.subr.mxu0 0.0
    %209 = vmatpush1.msra.mxu0 %v188
    %210 = vmatprep.subr.mxu0 0.0
    %211 = vmatpush1.msra.mxu0 0.0
    %212 = vmatprep.subr.mxu0 0.0
    %213 = vmatpush1.msra.mxu0 0.0
    %214 = vmatprep.subr.mxu0 0.0
    %215 = vmatpush1.msra.mxu0 0.0
    %216 = vmatprep.subr.mxu0 0.0
    %217 = vmatpush1.msra.mxu0 0.0
    %218 = vmatprep.subr.mxu0 0.0
    %219 = vmatpush1.msra.mxu0 0.0
    %220 = vmatprep.subr.mxu0 0.0
    %221 = vmatpush1.msra.mxu0 0.0
    %222 = vmatprep.subr.mxu0 0.0
    %223 = vmatpush1.msra.mxu0 0.0
    %224 = vmatprep.subr.mxu0 0.0
    %225 = vmatpush1.msra.mxu0 0.0
    %226 = vmatprep.subr.mxu0 0.0
    %227 = vmatpush1.msra.mxu0 0.0
    %228 = vmatprep.subr.mxu0 0.0
    %229 = vmatpush1.msra.mxu0 0.0
    %230 = vmatprep.subr.mxu0 0.0
    %231 = vmatpush1.msra.mxu0 0.0
    %232 = vmatprep.subr.mxu0 0.0
    %233 = vmatpush1.msra.mxu0 0.0
    %234 = vmatprep.subr.mxu0 0.0
    %235 = vmatpush1.msra.mxu0 0.0
    %236 = vmatprep.subr.mxu0 0.0
    %237 = vmatpush1.msra.mxu0 0.0
    %238 = vmatprep.subr.mxu0 0.0
    %239 = vmatpush1.msra.mxu0 0.0
    %240 = vmatprep.subr.mxu0 0.0
    %241 = vmatpush1.msra.mxu0 0.0
    %242 = vmatprep.subr.mxu0 0.0
    %243 = vmatpush1.msra.mxu0 0.0
    %244 = vmatprep.subr.mxu0 0.0
    %245 = vmatpush1.msra.mxu0 0.0
    %246 = vmatprep.subr.mxu0 0.0
    %247 = vmatpush1.msra.mxu0 0.0
    %248 = vmatprep.subr.mxu0 0.0
    %249 = vmatpush1.msra.mxu0 0.0
    %250 = vmatprep.subr.mxu0 0.0
    %251 = vmatpush1.msra.mxu0 0.0
    %252 = vmatprep.subr.mxu0 0.0
    %253 = vmatpush1.msra.mxu0 0.0
    %254 = vmatprep.subr.mxu0 0.0
    %255 = vmatpush1.msra.mxu0 0.0
    %256 = vmatprep.subr.mxu0 0.0
    %257 = vmatpush1.msra.mxu0 0.0
    %258 = vmatprep.subr.mxu0 0.0
    %259 = vmatpush1.msra.mxu0 0.0
    %260 = vmatprep.subr.mxu0 0.0
    %261 = vmatpush1.msra.mxu0 0.0
    %262 = vmatprep.subr.mxu0 0.0
    %263 = vmatpush1.msra.mxu0 0.0
    %264 = vmatprep.subr.mxu0 0.0
    %265 = vmatpush1.msra.mxu0 0.0
    %266 = vmatprep.mubr.f32.mxu0 0.0
    %267 = vmatmul.mubr.f32.gmra.mrb[0].mxu0 %v191
    %v268 = vpop.f32.mrb[0].mxu0
    %v269 = vadd.f32 0.0, %v268
    %v270 = vpop.f32.mrb[0].mxu0
    %271 = vmatprep.mubr.f32.mxu0 0.0
    %272 = vmatmul.mubr.f32.gmra.mrb[0].mxu0 %v194
    %v273 = vpop.f32.mrb[0].mxu0
    %v274 = vadd.f32 0.0, %v273
    %v275 = vpop.f32.mrb[0].mxu0
    %276 = vmatprep.mubr.f32.mxu0 0.0
    %277 = vmatmul.mubr.f32.gmra.mrb[0].mxu0 %v197
    %v278 = vpop.f32.mrb[0].mxu0
    %v279 = vadd.f32 0.0, %v278
    %v280 = vpop.f32.mrb[0].mxu0
    %281 = vmatprep.mubr.f32.mxu0 0.0
    %282 = vmatmul.mubr.f32.gmra.mrb[0].mxu0 %v200
    %v283 = vpop.f32.mrb[0].mxu0
    %v284 = vadd.f32 0.0, %v283
    %v285 = vpop.f32.mrb[0].mxu0
    %286 = vdwg.mxu0
    %v288 = vsel %vm189, %v152, 0
    %v291 = vsel %vm189, %v157, 0
    %v294 = vsel %vm189, %v162, 0
    %v297 = vsel %vm189, %v167, 0
    %299 = vmatprep.subr.mxu0 0.0
    %300 = vmatpush1.msra.mxu0 %v170
    %301 = vmatprep.subr.mxu0 0.0
    %302 = vmatpush1.msra.mxu0 %v171
    %303 = vmatprep.subr.mxu0 0.0
    %304 = vmatpush1.msra.mxu0 %v172
    %305 = vmatprep.subr.mxu0 0.0
    %306 = vmatpush1.msra.mxu0 %v173
    %307 = vmatprep.subr.mxu0 0.0
    %308 = vmatpush1.msra.mxu0 0.0
    %309 = vmatprep.subr.mxu0 0.0
    %310 = vmatpush1.msra.mxu0 0.0
    %311 = vmatprep.subr.mxu0 0.0
    %312 = vmatpush1.msra.mxu0 0.0
    %313 = vmatprep.subr.mxu0 0.0
    %314 = vmatpush1.msra.mxu0 0.0
    %315 = vmatprep.subr.mxu0 0.0
    %316 = vmatpush1.msra.mxu0 0.0
    %317 = vmatprep.subr.mxu0 0.0
    %318 = vmatpush1.msra.mxu0 0.0
    %319 = vmatprep.subr.mxu0 0.0
    %320 = vmatpush1.msra.mxu0 0.0
    %321 = vmatprep.subr.mxu0 0.0
    %322 = vmatpush1.msra.mxu0 0.0
    %323 = vmatprep.subr.mxu0 0.0
    %324 = vmatpush1.msra.mxu0 0.0
    %325 = vmatprep.subr.mxu0 0.0
    %326 = vmatpush1.msra.mxu0 0.0
    %327 = vmatprep.subr.mxu0 0.0
    %328 = vmatpush1.msra.mxu0 0.0
    %329 = vmatprep.subr.mxu0 0.0
    %330 = vmatpush1.msra.mxu0 0.0
    %331 = vmatprep.subr.mxu0 0.0
    %332 = vmatpush1.msra.mxu0 0.0
    %333 = vmatprep.subr.mxu0 0.0
    %334 = vmatpush1.msra.mxu0 0.0
    %335 = vmatprep.subr.mxu0 0.0
    %336 = vmatpush1.msra.mxu0 0.0
    %337 = vmatprep.subr.mxu0 0.0
    %338 = vmatpush1.msra.mxu0 0.0
    %339 = vmatprep.subr.mxu0 0.0
    %340 = vmatpush1.msra.mxu0 0.0
    %341 = vmatprep.subr.mxu0 0.0
    %342 = vmatpush1.msra.mxu0 0.0
    %343 = vmatprep.subr.mxu0 0.0
    %344 = vmatpush1.msra.mxu0 0.0
    %345 = vmatprep.subr.mxu0 0.0
    %346 = vmatpush1.msra.mxu0 0.0
    %347 = vmatprep.subr.mxu0 0.0
    %348 = vmatpush1.msra.mxu0 0.0
    %349 = vmatprep.subr.mxu0 0.0
    %350 = vmatpush1.msra.mxu0 0.0
    %351 = vmatprep.subr.mxu0 0.0
    %352 = vmatpush1.msra.mxu0 0.0
    %353 = vmatprep.subr.mxu0 0.0
    %354 = vmatpush1.msra.mxu0 0.0
    %355 = vmatprep.subr.mxu0 0.0
    %356 = vmatpush1.msra.mxu0 0.0
    %357 = vmatprep.subr.mxu0 0.0
    %358 = vmatpush1.msra.mxu0 0.0
    %359 = vmatprep.subr.mxu0 0.0
    %360 = vmatpush1.msra.mxu0 0.0
    %361 = vmatprep.subr.mxu0 0.0
    %362 = vmatpush1.msra.mxu0 0.0
    %363 = vmatprep.mubr.f32.mxu0 0.0
    %364 = vmatmul.mubr.f32.gmra.mrb[0].mxu0 %v288
    %v365 = vpop.f32.mrb[0].mxu0
    %v366 = vadd.f32 %v269, %v365
    %v367 = vpop.f32.mrb[0].mxu0
    %368 = vmatprep.mubr.f32.mxu0 0.0
    %369 = vmatmul.mubr.f32.gmra.mrb[0].mxu0 %v291
    %v370 = vpop.f32.mrb[0].mxu0
    %v371 = vadd.f32 %v274, %v370
    %v372 = vpop.f32.mrb[0].mxu0
    %373 = vmatprep.mubr.f32.mxu0 0.0
    %374 = vmatmul.mubr.f32.gmra.mrb[0].mxu0 %v294
    %v375 = vpop.f32.mrb[0].mxu0
    %v376 = vadd.f32 %v279, %v375
    %v377 = vpop.f32.mrb[0].mxu0
    %378 = vmatprep.mubr.f32.mxu0 0.0
    %379 = vmatmul.mubr.f32.gmra.mrb[0].mxu0 %v297
    %v380 = vpop.f32.mrb[0].mxu0
    %v381 = vadd.f32 %v284, %v380
    %v382 = vpop.f32.mrb[0].mxu0
    %383 = vdwg.mxu0
    %v384 = vrot.slane %v152, 2
    %v385 = vrot.slane %v157, 2
    %v386 = vrot.slane %v162, 2
    %v387 = vrot.slane %v167, 2
    %vm388 = vcmp.lt.s32.totalorder %v179, 6
    %v389 = vsel %vm388, %v386, %v387
    %v390 = vsel %vm388, %v385, %v386
    %v391 = vsel %vm388, %v384, %v385
    %v392 = vsel %vm388, %v387, %v384
    %v393 = vld [vmem:[%s2 + $0x40] sm:$0xff]
    %v394 = vld [vmem:[%s2 + $0x48] sm:$0xff]
    %v395 = vld [vmem:[%s2 + $0x50] sm:$0xff]
    %v396 = vld [vmem:[%s2 + $0x58] sm:$0xff]
    %v398 = vsel %vm189, %v391, 0
    %v401 = vsel %vm189, %v390, 0
    %v404 = vsel %vm189, %v389, 0
    %v407 = vsel %vm189, %v392, 0
    %409 = vmatprep.subr.mxu0 0.0
    %410 = vmatpush1.msra.mxu0 %v393
    %411 = vmatprep.subr.mxu0 0.0
    %412 = vmatpush1.msra.mxu0 %v394
    %413 = vmatprep.subr.mxu0 0.0
    %414 = vmatpush1.msra.mxu0 %v395
    %415 = vmatprep.subr.mxu0 0.0
    %416 = vmatpush1.msra.mxu0 %v396
    %417 = vmatprep.subr.mxu0 0.0
    %418 = vmatpush1.msra.mxu0 0.0
    %419 = vmatprep.subr.mxu0 0.0
    %420 = vmatpush1.msra.mxu0 0.0
    %421 = vmatprep.subr.mxu0 0.0
    %422 = vmatpush1.msra.mxu0 0.0
    %423 = vmatprep.subr.mxu0 0.0
    %424 = vmatpush1.msra.mxu0 0.0
    %425 = vmatprep.subr.mxu0 0.0
    %426 = vmatpush1.msra.mxu0 0.0
    %427 = vmatprep.subr.mxu0 0.0
    %428 = vmatpush1.msra.mxu0 0.0
    %429 = vmatprep.subr.mxu0 0.0
    %430 = vmatpush1.msra.mxu0 0.0
    %431 = vmatprep.subr.mxu0 0.0
    %432 = vmatpush1.msra.mxu0 0.0
    %433 = vmatprep.subr.mxu0 0.0
    %434 = vmatpush1.msra.mxu0 0.0
    %435 = vmatprep.subr.mxu0 0.0
    %436 = vmatpush1.msra.mxu0 0.0
    %437 = vmatprep.subr.mxu0 0.0
    %438 = vmatpush1.msra.mxu0 0.0
    %439 = vmatprep.subr.mxu0 0.0
    %440 = vmatpush1.msra.mxu0 0.0
    %441 = vmatprep.subr.mxu0 0.0
    %442 = vmatpush1.msra.mxu0 0.0
    %443 = vmatprep.subr.mxu0 0.0
    %444 = vmatpush1.msra.mxu0 0.0
    %445 = vmatprep.subr.mxu0 0.0
    %446 = vmatpush1.msra.mxu0 0.0
    %447 = vmatprep.subr.mxu0 0.0
    %448 = vmatpush1.msra.mxu0 0.0
    %449 = vmatprep.subr.mxu0 0.0
    %450 = vmatpush1.msra.mxu0 0.0
    %451 = vmatprep.subr.mxu0 0.0
    %452 = vmatpush1.msra.mxu0 0.0
    %453 = vmatprep.subr.mxu0 0.0
    %454 = vmatpush1.msra.mxu0 0.0
    %455 = vmatprep.subr.mxu0 0.0
    %456 = vmatpush1.msra.mxu0 0.0
    %457 = vmatprep.subr.mxu0 0.0
    %458 = vmatpush1.msra.mxu0 0.0
    %459 = vmatprep.subr.mxu0 0.0
    %460 = vmatpush1.msra.mxu0 0.0
    %461 = vmatprep.subr.mxu0 0.0
    %462 = vmatpush1.msra.mxu0 0.0
    %463 = vmatprep.subr.mxu0 0.0
    %464 = vmatpush1.msra.mxu0 0.0
    %465 = vmatprep.subr.mxu0 0.0
    %466 = vmatpush1.msra.mxu0 0.0
    %467 = vmatprep.subr.mxu0 0.0
    %468 = vmatpush1.msra.mxu0 0.0
    %469 = vmatprep.subr.mxu0 0.0
    %470 = vmatpush1.msra.mxu0 0.0
    %471 = vmatprep.subr.mxu0 0.0
    %472 = vmatpush1.msra.mxu0 0.0
    %473 = vmatprep.mubr.f32.mxu0 0.0
    %474 = vmatmul.mubr.f32.gmra.mrb[0].mxu0 %v398
    %v475 = vpop.f32.mrb[0].mxu0
    %v476 = vadd.f32 0.0, %v475
    %v477 = vpop.f32.mrb[0].mxu0
    %478 = vmatprep.mubr.f32.mxu0 0.0
    %479 = vmatmul.mubr.f32.gmra.mrb[0].mxu0 %v401
    %v480 = vpop.f32.mrb[0].mxu0
    %v481 = vadd.f32 0.0, %v480
    %v482 = vpop.f32.mrb[0].mxu0
    %483 = vmatprep.mubr.f32.mxu0 0.0
    %484 = vmatmul.mubr.f32.gmra.mrb[0].mxu0 %v404
    %v485 = vpop.f32.mrb[0].mxu0
    %v486 = vadd.f32 0.0, %v485
    %v487 = vpop.f32.mrb[0].mxu0
    %488 = vmatprep.mubr.f32.mxu0 0.0
    %489 = vmatmul.mubr.f32.gmra.mrb[0].mxu0 %v407
    %v490 = vpop.f32.mrb[0].mxu0
    %v491 = vadd.f32 0.0, %v490
    %v492 = vpop.f32.mrb[0].mxu0
    %493 = vdwg.mxu0
    %v494 = vadd.f32 %v366, %v476
    %v495 = vadd.f32 %v371, %v481
    %v496 = vadd.f32 %v376, %v486
    %v497 = vadd.f32 %v381, %v491
    %v498 = vrot.slane %v152, 3
    %v499 = vrot.slane %v157, 3
    %v500 = vrot.slane %v162, 3
    %v501 = vrot.slane %v167, 3
    %vm502 = vcmp.lt.s32.totalorder %v179, 5
    %v503 = vsel %vm502, %v500, %v501
    %v504 = vsel %vm502, %v499, %v500
    %v505 = vsel %vm502, %v498, %v499
    %v506 = vsel %vm502, %v501, %v498
    %v507 = vld [vmem:[%s2 + $0x60] sm:$0xff]
    %v508 = vld [vmem:[%s2 + $0x68] sm:$0xff]
    %v509 = vld [vmem:[%s2 + $0x70] sm:$0xff]
    %v510 = vld [vmem:[%s2 + $0x78] sm:$0xff]
    %v512 = vsel %vm189, %v505, 0
    %v515 = vsel %vm189, %v504, 0
    %v518 = vsel %vm189, %v503, 0
    %v521 = vsel %vm189, %v506, 0
    %523 = vmatprep.subr.mxu0 0.0
    %524 = vmatpush1.msra.mxu0 %v507
    %525 = vmatprep.subr.mxu0 0.0
    %526 = vmatpush1.msra.mxu0 %v508
    %527 = vmatprep.subr.mxu0 0.0
    %528 = vmatpush1.msra.mxu0 %v509
    %529 = vmatprep.subr.mxu0 0.0
    %530 = vmatpush1.msra.mxu0 %v510
    %531 = vmatprep.subr.mxu0 0.0
    %532 = vmatpush1.msra.mxu0 0.0
    %533 = vmatprep.subr.mxu0 0.0
    %534 = vmatpush1.msra.mxu0 0.0
    %535 = vmatprep.subr.mxu0 0.0
    %536 = vmatpush1.msra.mxu0 0.0
    %537 = vmatprep.subr.mxu0 0.0
    %538 = vmatpush1.msra.mxu0 0.0
    %539 = vmatprep.subr.mxu0 0.0
    %540 = vmatpush1.msra.mxu0 0.0
    %541 = vmatprep.subr.mxu0 0.0
    %542 = vmatpush1.msra.mxu0 0.0
    %543 = vmatprep.subr.mxu0 0.0
    %544 = vmatpush1.msra.mxu0 0.0
    %545 = vmatprep.subr.mxu0 0.0
    %546 = vmatpush1.msra.mxu0 0.0
    %547 = vmatprep.subr.mxu0 0.0
    %548 = vmatpush1.msra.mxu0 0.0
    %549 = vmatprep.subr.mxu0 0.0
    %550 = vmatpush1.msra.mxu0 0.0
    %551 = vmatprep.subr.mxu0 0.0
    %552 = vmatpush1.msra.mxu0 0.0
    %553 = vmatprep.subr.mxu0 0.0
    %554 = vmatpush1.msra.mxu0 0.0
    %555 = vmatprep.subr.mxu0 0.0
    %556 = vmatpush1.msra.mxu0 0.0
    %557 = vmatprep.subr.mxu0 0.0
    %558 = vmatpush1.msra.mxu0 0.0
    %559 = vmatprep.subr.mxu0 0.0
    %560 = vmatpush1.msra.mxu0 0.0
    %561 = vmatprep.subr.mxu0 0.0
    %562 = vmatpush1.msra.mxu0 0.0
    %563 = vmatprep.subr.mxu0 0.0
    %564 = vmatpush1.msra.mxu0 0.0
    %565 = vmatprep.subr.mxu0 0.0
    %566 = vmatpush1.msra.mxu0 0.0
    %567 = vmatprep.subr.mxu0 0.0
    %568 = vmatpush1.msra.mxu0 0.0
    %569 = vmatprep.subr.mxu0 0.0
    %570 = vmatpush1.msra.mxu0 0.0
    %571 = vmatprep.subr.mxu0 0.0
    %572 = vmatpush1.msra.mxu0 0.0
    %573 = vmatprep.subr.mxu0 0.0
    %574 = vmatpush1.msra.mxu0 0.0
    %575 = vmatprep.subr.mxu0 0.0
    %576 = vmatpush1.msra.mxu0 0.0
    %577 = vmatprep.subr.mxu0 0.0
    %578 = vmatpush1.msra.mxu0 0.0
    %579 = vmatprep.subr.mxu0 0.0
    %580 = vmatpush1.msra.mxu0 0.0
    %581 = vmatprep.subr.mxu0 0.0
    %582 = vmatpush1.msra.mxu0 0.0
    %583 = vmatprep.subr.mxu0 0.0
    %584 = vmatpush1.msra.mxu0 0.0
    %585 = vmatprep.subr.mxu0 0.0
    %586 = vmatpush1.msra.mxu0 0.0
    %587 = vmatprep.mubr.f32.mxu0 0.0
    %588 = vmatmul.mubr.f32.gmra.mrb[0].mxu0 %v512
    %v589 = vpop.f32.mrb[0].mxu0
    %v590 = vadd.f32 0.0, %v589
    %v591 = vpop.f32.mrb[0].mxu0
    %592 = vmatprep.mubr.f32.mxu0 0.0
    %593 = vmatmul.mubr.f32.gmra.mrb[0].mxu0 %v515
    %v594 = vpop.f32.mrb[0].mxu0
    %v595 = vadd.f32 0.0, %v594
    %v596 = vpop.f32.mrb[0].mxu0
    %597 = vmatprep.mubr.f32.mxu0 0.0
    %598 = vmatmul.mubr.f32.gmra.mrb[0].mxu0 %v518
    %v599 = vpop.f32.mrb[0].mxu0
    %v600 = vadd.f32 0.0, %v599
    %v601 = vpop.f32.mrb[0].mxu0
    %602 = vmatprep.mubr.f32.mxu0 0.0
    %603 = vmatmul.mubr.f32.gmra.mrb[0].mxu0 %v521
    %v604 = vpop.f32.mrb[0].mxu0
    %v605 = vadd.f32 0.0, %v604
    %v606 = vpop.f32.mrb[0].mxu0
    %607 = vdwg.mxu0
    %v608 = vadd.f32 %v494, %v590
    %v609 = vadd.f32 %v495, %v595
    %v610 = vadd.f32 %v496, %v600
    %v611 = vadd.f32 %v497, %v605
    %v612 = vrot.slane %v152, 4
    %v613 = vrot.slane %v157, 4
    %v614 = vrot.slane %v162, 4
    %v615 = vrot.slane %v167, 4
    %vm616 = vcmp.lt.s32.totalorder %v179, 4
    %v617 = vsel %vm616, %v614, %v615
    %v618 = vsel %vm616, %v613, %v614
    %v619 = vsel %vm616, %v612, %v613
    %v620 = vsel %vm616, %v615, %v612
    %v621 = vld [vmem:[%s2 + $0x80] sm:$0xff]
    %v622 = vld [vmem:[%s2 + $0x88] sm:$0xff]
    %v623 = vld [vmem:[%s2 + $0x90] sm:$0xff]
    %v624 = vld [vmem:[%s2 + $0x98] sm:$0xff]
    %v626 = vsel %vm189, %v619, 0
    %v629 = vsel %vm189, %v618, 0
    %v632 = vsel %vm189, %v617, 0
    %v635 = vsel %vm189, %v620, 0
    %637 = vmatprep.subr.mxu0 0.0
    %638 = vmatpush1.msra.mxu0 %v621
    %639 = vmatprep.subr.mxu0 0.0
    %640 = vmatpush1.msra.mxu0 %v622
    %641 = vmatprep.subr.mxu0 0.0
    %642 = vmatpush1.msra.mxu0 %v623
    %643 = vmatprep.subr.mxu0 0.0
    %644 = vmatpush1.msra.mxu0 %v624
    %645 = vmatprep.subr.mxu0 0.0
    %646 = vmatpush1.msra.mxu0 0.0
    %647 = vmatprep.subr.mxu0 0.0
    %648 = vmatpush1.msra.mxu0 0.0
    %649 = vmatprep.subr.mxu0 0.0
    %650 = vmatpush1.msra.mxu0 0.0
    %651 = vmatprep.subr.mxu0 0.0
    %652 = vmatpush1.msra.mxu0 0.0
    %653 = vmatprep.subr.mxu0 0.0
    %654 = vmatpush1.msra.mxu0 0.0
    %655 = vmatprep.subr.mxu0 0.0
    %656 = vmatpush1.msra.mxu0 0.0
    %657 = vmatprep.subr.mxu0 0.0
    %658 = vmatpush1.msra.mxu0 0.0
    %659 = vmatprep.subr.mxu0 0.0
    %660 = vmatpush1.msra.mxu0 0.0
    %661 = vmatprep.subr.mxu0 0.0
    %662 = vmatpush1.msra.mxu0 0.0
    %663 = vmatprep.subr.mxu0 0.0
    %664 = vmatpush1.msra.mxu0 0.0
    %665 = vmatprep.subr.mxu0 0.0
    %666 = vmatpush1.msra.mxu0 0.0
    %667 = vmatprep.subr.mxu0 0.0
    %668 = vmatpush1.msra.mxu0 0.0
    %669 = vmatprep.subr.mxu0 0.0
    %670 = vmatpush1.msra.mxu0 0.0
    %671 = vmatprep.subr.mxu0 0.0
    %672 = vmatpush1.msra.mxu0 0.0
    %673 = vmatprep.subr.mxu0 0.0
    %674 = vmatpush1.msra.mxu0 0.0
    %675 = vmatprep.subr.mxu0 0.0
    %676 = vmatpush1.msra.mxu0 0.0
    %677 = vmatprep.subr.mxu0 0.0
    %678 = vmatpush1.msra.mxu0 0.0
    %679 = vmatprep.subr.mxu0 0.0
    %680 = vmatpush1.msra.mxu0 0.0
    %681 = vmatprep.subr.mxu0 0.0
    %682 = vmatpush1.msra.mxu0 0.0
    %683 = vmatprep.subr.mxu0 0.0
    %684 = vmatpush1.msra.mxu0 0.0
    %685 = vmatprep.subr.mxu0 0.0
    %686 = vmatpush1.msra.mxu0 0.0
    %687 = vmatprep.subr.mxu0 0.0
    %688 = vmatpush1.msra.mxu0 0.0
    %689 = vmatprep.subr.mxu0 0.0
    %690 = vmatpush1.msra.mxu0 0.0
    %691 = vmatprep.subr.mxu0 0.0
    %692 = vmatpush1.msra.mxu0 0.0
    %693 = vmatprep.subr.mxu0 0.0
    %694 = vmatpush1.msra.mxu0 0.0
    %695 = vmatprep.subr.mxu0 0.0
    %696 = vmatpush1.msra.mxu0 0.0
    %697 = vmatprep.subr.mxu0 0.0
    %698 = vmatpush1.msra.mxu0 0.0
    %699 = vmatprep.subr.mxu0 0.0
    %700 = vmatpush1.msra.mxu0 0.0
    %701 = vmatprep.mubr.f32.mxu0 0.0
    %702 = vmatmul.mubr.f32.gmra.mrb[0].mxu0 %v626
    %v703 = vpop.f32.mrb[0].mxu0
    %v704 = vadd.f32 0.0, %v703
    %v705 = vpop.f32.mrb[0].mxu0
    %706 = vmatprep.mubr.f32.mxu0 0.0
    %707 = vmatmul.mubr.f32.gmra.mrb[0].mxu0 %v629
    %v708 = vpop.f32.mrb[0].mxu0
    %v709 = vadd.f32 0.0, %v708
    %v710 = vpop.f32.mrb[0].mxu0
    %711 = vmatprep.mubr.f32.mxu0 0.0
    %712 = vmatmul.mubr.f32.gmra.mrb[0].mxu0 %v632
    %v713 = vpop.f32.mrb[0].mxu0
    %v714 = vadd.f32 0.0, %v713
    %v715 = vpop.f32.mrb[0].mxu0
    %716 = vmatprep.mubr.f32.mxu0 0.0
    %717 = vmatmul.mubr.f32.gmra.mrb[0].mxu0 %v635
    %v718 = vpop.f32.mrb[0].mxu0
    %v719 = vadd.f32 0.0, %v718
    %v720 = vpop.f32.mrb[0].mxu0
    %721 = vdwg.mxu0
    %v722 = vadd.f32 %v608, %v704
    %v723 = vadd.f32 %v609, %v709
    %v724 = vadd.f32 %v610, %v714
    %v725 = vadd.f32 %v611, %v719
    %v726 = vld [vmem:[%s2 + $0xa0] sm:$0x1]
    %v727 = vlaneseq
    %v728 = vshrl.u32 %v727, 7
    %v729 = vsub.s32 0, %v728
    %v730 = vrot.slane %v726, %v729
    %v731 = vadd.f32 %v722, %v730
    %v732 = vadd.f32 %v723, %v730
    %v733 = vadd.f32 %v724, %v730
    %v734 = vadd.f32 %v725, %v730
    %v735 = vmax.f32 %v731, 0.0
    %v736 = vmax.f32 %v732, 0.0
    %v737 = vmax.f32 %v733, 0.0
    %v738 = vmax.f32 %v734, 0.0
    %v739 = vld [vmem:[%s4] sm:$0xff]
    %v740 = vld [vmem:[%s4 + $0x8] sm:$0xff]
    %v741 = vmul.f32 %v735, %v739
    %v742 = vmul.f32 %v736, %v740
    %v743 = vmul.f32 %v737, %v739
    %v744 = vmul.f32 %v738, %v740
    %v745 = vmax.f32 %v741, %v742
    %v746 = vrot.slane %v745, 4
    %v747 = vmax.f32 %v745, %v746
    %v748 = vrot.slane %v747, 2
    %v749 = vmax.f32 %v747, %v748
    %v750 = vrot.slane %v749, 1
    %v751 = vmax.f32 %v749, %v750
    %v752 = vmax.f32 %v743, %v744
    %v753 = vrot.slane %v752, 4
    %v754 = vmax.f32 %v752, %v753
    %v755 = vrot.slane %v754, 2
    %v756 = vmax.f32 %v754, %v755
    %v757 = vrot.slane %v756, 1
    %v758 = vmax.f32 %v756, %v757
    %v759 = vld [vmem:[#allocation2] sm:$0xff]
    %v760 = vld [vmem:[#allocation2 + $0x8] sm:$0xff]
    %v761 = vld [vmem:[#allocation2 + $0x10] sm:$0xff]
    %v762 = vld [vmem:[#allocation2 + $0x18] sm:$0xff]
    %v763 = vld [vmem:[#allocation2 + $0x20] sm:$0xff]
    %v764 = vld [vmem:[#allocation2 + $0x28] sm:$0xff]
    %v765 = vld [vmem:[#allocation2 + $0x30] sm:$0xff]
    %v766 = vld [vmem:[#allocation2 + $0x38] sm:$0xff]
    %v767 = vld [vmem:[#allocation2 + $0x40] sm:$0xff]
    %v768 = vld [vmem:[#allocation2 + $0x48] sm:$0xff]
    %v769 = vld [vmem:[#allocation2 + $0x50] sm:$0xff]
    %v770 = vld [vmem:[#allocation2 + $0x58] sm:$0xff]
    %v771 = vld [vmem:[#allocation2 + $0x60] sm:$0xff]
    %v772 = vld [vmem:[#allocation2 + $0x68] sm:$0xff]
    %v773 = vld [vmem:[#allocation2 + $0x70] sm:$0xff]
    %v774 = vld [vmem:[#allocation2 + $0x78] sm:$0xff]
    %v775 = vld [vmem:[#allocation2 + $0x80] sm:$0x1]
    %v776 = vlaneseq
    %v777 = vshrl.u32 %v776, 7
    %v778 = vsub.s32 0, %v777
    %v779 = vrot.slane %v775, %v778
    %vm782 = vcmask 1041409
    %v783 = vsel %vm782, %v758, %v751
    %785 = vmatprep.subr.mxu0 0.0
    %786 = vmatpush1.msra.mxu0 %v759
    %787 = vmatprep.subr.mxu0 0.0
    %788 = vmatpush1.msra.mxu0 %v760
    %789 = vmatprep.subr.mxu0 0.0
    %790 = vmatpush1.msra.mxu0 %v761
    %791 = vmatprep.subr.mxu0 0.0
    %792 = vmatpush1.msra.mxu0 %v762
    %793 = vmatprep.subr.mxu0 0.0
    %794 = vmatpush1.msra.mxu0 %v763
    %795 = vmatprep.subr.mxu0 0.0
    %796 = vmatpush1.msra.mxu0 %v764
    %797 = vmatprep.subr.mxu0 0.0
    %798 = vmatpush1.msra.mxu0 %v765
    %799 = vmatprep.subr.mxu0 0.0
    %800 = vmatpush1.msra.mxu0 %v766
    %801 = vmatprep.subr.mxu0 0.0
    %802 = vmatpush1.msra.mxu0 %v767
    %803 = vmatprep.subr.mxu0 0.0
    %804 = vmatpush1.msra.mxu0 %v768
    %805 = vmatprep.subr.mxu0 0.0
    %806 = vmatpush1.msra.mxu0 %v769
    %807 = vmatprep.subr.mxu0 0.0
    %808 = vmatpush1.msra.mxu0 %v770
    %809 = vmatprep.subr.mxu0 0.0
    %810 = vmatpush1.msra.mxu0 %v771
    %811 = vmatprep.subr.mxu0 0.0
    %812 = vmatpush1.msra.mxu0 %v772
    %813 = vmatprep.subr.mxu0 0.0
    %814 = vmatpush1.msra.mxu0 %v773
    %815 = vmatprep.subr.mxu0 0.0
    %816 = vmatpush1.msra.mxu0 %v774
    %817 = vmatprep.subr.mxu0 0.0
    %818 = vmatpush1.msra.mxu0 0.0
    %819 = vmatprep.subr.mxu0 0.0
    %820 = vmatpush1.msra.mxu0 0.0
    %821 = vmatprep.subr.mxu0 0.0
    %822 = vmatpush1.msra.mxu0 0.0
    %823 = vmatprep.subr.mxu0 0.0
    %824 = vmatpush1.msra.mxu0 0.0
    %825 = vmatprep.subr.mxu0 0.0
    %826 = vmatpush1.msra.mxu0 0.0
    %827 = vmatprep.subr.mxu0 0.0
    %828 = vmatpush1.msra.mxu0 0.0
    %829 = vmatprep.subr.mxu0 0.0
    %830 = vmatpush1.msra.mxu0 0.0
    %831 = vmatprep.subr.mxu0 0.0
    %832 = vmatpush1.msra.mxu0 0.0
    %833 = vmatprep.subr.mxu0 0.0
    %834 = vmatpush1.msra.mxu0 0.0
    %835 = vmatprep.subr.mxu0 0.0
    %836 = vmatpush1.msra.mxu0 0.0
    %837 = vmatprep.subr.mxu0 0.0
    %838 = vmatpush1.msra.mxu0 0.0
    %839 = vmatprep.subr.mxu0 0.0
    %840 = vmatpush1.msra.mxu0 0.0
    %841 = vmatprep.subr.mxu0 0.0
    %842 = vmatpush1.msra.mxu0 0.0
    %843 = vmatprep.subr.mxu0 0.0
    %844 = vmatpush1.msra.mxu0 0.0
    %845 = vmatprep.subr.mxu0 0.0
    %846 = vmatpush1.msra.mxu0 0.0
    %847 = vmatprep.subr.mxu0 0.0
    %848 = vmatpush1.msra.mxu0 0.0
    %849 = vmatprep.mubr.f32.mxu0 0.0
    %850 = vmatmul.mubr.f32.gmra.mrb[0].mxu0 %v783
    %v851 = vpop.f32.mrb[0].mxu0
    %v852 = vadd.f32 %v779, %v851
    %v853 = vpop.f32.mrb[0].mxu0
    %854 = vdwg.mxu0
    %855 = vst [vmem:[#allocation5] sm:$0x3] %v852
    // Predicated region
    $region26: #{classifier_forward.1} parent=1 // pred_check
      _
    $region27: #{classifier_forward.1} parent=1 // pred_check_branch
      %857 = sbr.rel (0) target = $region29
    $region28: #{classifier_forward.1} parent=1 // pred_region
      %s859 = ssub.s32 32, 32
      %860 = vsyncadd [#allocation4], %s859
      %s862 = sshll.u32 [#allocation5], 4
      %s863 = int_to_ptr.vmem [resolvable:$true] %s862
      %865 = dma.vmem_to_hbm [thread:$0]  %s863, 32, %s5, [#allocation4]
    $region29: #{classifier_forward.1} parent=1 // pred_fallthru
      _
    // Predicated region
    $region30: #{classifier_forward.1} parent=1 // pred_check
      _
    $region31: #{classifier_forward.1} parent=1 // pred_check_branch
      %867 = sbr.rel (0) target = $region33
    $region32: #{classifier_forward.1} parent=1 // pred_region
      %868 = dma.done [#allocation4], 32
    $region33: #{classifier_forward.1} parent=1 // pred_fallthru
      _
    %869 = vsyncpa [#allocation3], 1
    %870 = vsyncpa [#allocation4], 1

</llo_original>
